<compile_context>
chip_gen: v5e
topology: v5e:2x2
jax: 0.10.0
libtpu: 0.0.40
codegen_flags: <defaults>
</compile_context>

<pallas_src>
import jax
import jax.numpy as jnp
from jax.experimental import pallas as pl
from jax.experimental.pallas import tpu as pltpu


# --------------------------------------------------------------------------
# Pallas kernel: out[r, :] = sum_f table[idx[r, f], :]
# --------------------------------------------------------------------------
def _embed_sum_kernel(idx_ref, tab_ref, out_ref):
    # idx_ref: (tn, F) int32, already offset into the concatenated vocab.
    # tab_ref: (Vp, Dp) table, whole table resident in VMEM (single buffer).
    # out_ref: (tn, Dp).
    idx = idx_ref[...]
    tab = tab_ref[...]
    tn, num_features = idx.shape
    v_total = tab.shape[0]

    # (1, Vp) iota broadcast against (tn, 1) index columns: avoids
    # materializing a full (tn, Vp) int32 iota every grid step (VALU trim).
    col = jax.lax.broadcasted_iota(jnp.int32, (1, v_total), 1)

    # Disjoint offset ranges + all-zero pad row => OR over features == sum.
    hot = col == idx[:, 0:1]
    for f in range(1, num_features):          # static unroll; F is tiny
        hot = jnp.logical_or(hot, col == idx[:, f:f + 1])

    if tab.dtype == jnp.bfloat16:
        # 0/1 is exact in bf16: single-pass MXU matmul, f32 accumulation.
        acc = jnp.dot(hot.astype(jnp.bfloat16), tab,
                      preferred_element_type=jnp.float32)
    else:
        # f32 table: pin HIGHEST so operands aren't silently truncated to
        # bf16 (keeps the gather+sum exactness claim).
        acc = jnp.dot(hot.astype(jnp.float32), tab,
                      preferred_element_type=jnp.float32,
                      precision=jax.lax.Precision.HIGHEST)
    out_ref[...] = acc.astype(out_ref.dtype)


def _round_up(x, m):
    return (x + m - 1) // m * m


def embed_sum(idx, table, *, tile_rows=512, out_dtype=jnp.float32):
    """sum_f table[idx[:, f]] for idx (N, F) int32, table (V, D)."""
    n, f = idx.shape
    v, d = table.shape

    # Lane-dense output: pad d_model up to a multiple of 128 (zero columns).
    dp = _round_up(d, 128)
    if dp != d:
        table = jnp.pad(table, ((0, 0), (0, dp - d)))
    # Lane-aligned K: pad vocab to a multiple of 128 with zero rows (never
    # addressed by any index, contribute nothing to the matmul).
    vp = _round_up(v, 128)
    if vp != v:
        table = jnp.pad(table, ((0, vp - v), (0, 0)))

    # Row tile: 512 default (output blocks near the HBM-writeback roofline on
    # v5e/v6e); for small inputs cap so the row grid has >= 2 steps, letting
    # the "parallel" axis split across v7x's two TensorCores.  Multiple of 8.
    tn = min(tile_rows, max(8, _round_up(-(-n // 2), 8)))
    n_pad = _round_up(n, tn)
    if n_pad != n:
        # Padded rows gather table row 0 (wasted but harmless compute); they
        # are sliced off below.
        idx = jnp.pad(idx, ((0, n_pad - n), (0, 0)))

    # Explicit VMEM budget: resident table + (tn, Vp) hot staging + double-
    # buffered idx/out tiles, with headroom.  Clamped under v7x's 64 MiB.
    tab_bytes = vp * dp * table.dtype.itemsize
    hot_bytes = tn * vp * table.dtype.itemsize
    io_bytes = 2 * tn * f * 4 + 2 * tn * dp * jnp.dtype(out_dtype).itemsize
    vmem_limit = int(min(64 * 2**20, max(32 * 2**20, 2 * (tab_bytes + hot_bytes + io_bytes))))

    out = pl.pallas_call(
        _embed_sum_kernel,
        out_shape=jax.ShapeDtypeStruct((n_pad, dp), out_dtype),
        grid=(n_pad // tn,),
        in_specs=[
            # Row tile of indices, pipelined along the row grid axis.
            pl.BlockSpec((tn, f), lambda i: (i, 0)),
            # Whole table, one resident VMEM copy (no double-buffering of a
            # block that never changes across grid steps).
            pl.BlockSpec(memory_space=pltpu.MemorySpace.VMEM),
        ],
        out_specs=pl.BlockSpec((tn, dp), lambda i: (i, 0)),
        compiler_params=pltpu.CompilerParams(
            dimension_semantics=("parallel",),   # v7x: shard rows over 2 TCs
            vmem_limit_bytes=vmem_limit),
    )(idx, table)

    if n_pad != n:
        out = out[:n]
    if dp != d:
        # NOTE: a lane-dim slice re-copies the whole output through HBM; keep
        # d_model a multiple of 128 in the model config to avoid it.
        out = out[:, :d]
    return out


# --------------------------------------------------------------------------
# Parameter construction (matches DiscreteEmbedding: xavier_uniform tables)
# --------------------------------------------------------------------------
def xavier_uniform(key, vocab, d_model, dtype):
    bound = (6.0 / (vocab + d_model)) ** 0.5
    w = jax.random.uniform(key, (vocab, d_model), jnp.float32, -bound, bound)
    return w.astype(dtype)


def make_discrete_embedding_params(key, d_features, d_model, dtype):
    """One (d_feature + 1, d_model) xavier-uniform table per feature."""
    keys = jax.random.split(key, len(d_features))
    return [xavier_uniform(k, df + 1, d_model, dtype) for k, df in zip(keys, d_features)]


def concat_tables(tables):
    """Concatenate tables along vocab; return (big_table, python offsets)."""
    offsets, off = [], 0
    for t in tables:
        offsets.append(off)
        off += t.shape[0]
    return jnp.concatenate(tables, axis=0), offsets


def _clamp_columns(idx, max_ids):
    """Clamp each index column into its table's valid range [0, max_id].

    NOTE: out-of-range inputs are mapped to the last valid row instead of
    raising (nn.Embedding would error); clamping also guarantees the
    disjoint-offset-range invariant the kernel relies on.
    """
    mx = jnp.asarray(max_ids, jnp.int32)[None, :]
    return jnp.clip(idx.astype(jnp.int32), 0, mx)


def _pad_features(idx, num_feats, pad_index):
    """Pad the feature axis with the all-zero-row index (adds nothing)."""
    n, f = idx.shape
    if f == num_feats:
        return idx
    pad = jnp.full((n, num_feats - f), pad_index, jnp.int32)
    return jnp.concatenate([idx, pad], axis=1)


# --------------------------------------------------------------------------
# GraphEmbedding forward, fused into a single Pallas launch
# --------------------------------------------------------------------------
class GraphEmbeddingPallas:
    """JAX/Pallas equivalent of GraphEmbedding.forward.

    Tables are stored in bf16 by default (MXU-native, half the VMEM/DMA);
    pass table_dtype=jnp.float32 for bit-level parity with f32 weights (the
    kernel then pins matmul precision to HIGHEST).
    """

    def __init__(self, key, d_model, atom_features_dim, bond_features_dim,
                 max_in_degree=10, max_out_degree=10,
                 table_dtype=jnp.bfloat16):
        k_atom, k_bond, k_zin, k_zout = jax.random.split(key, 4)
        self.atom_tables = make_discrete_embedding_params(
            k_atom, atom_features_dim, d_model, table_dtype)
        self.bond_tables = make_discrete_embedding_params(
            k_bond, bond_features_dim, d_model, table_dtype)
        self.zin_table = make_discrete_embedding_params(
            k_zin, [max_in_degree], d_model, table_dtype)[0]
        self.zout_table = make_discrete_embedding_params(
            k_zout, [max_out_degree], d_model, table_dtype)[0]

        na, nb = len(atom_features_dim), len(bond_features_dim)
        zero_row = jnp.zeros((1, d_model), table_dtype)   # feature-padding row
        self.table, offsets = concat_tables(
            self.atom_tables + [self.zin_table, self.zout_table]
            + self.bond_tables + [zero_row])

        self.node_offsets = jnp.asarray(offsets[:na + 2], jnp.int32)
        self.bond_offsets = jnp.asarray(offsets[na + 2:na + 2 + nb], jnp.int32)
        self.pad_index = offsets[-1]                      # the all-zero row
        self.node_max = list(atom_features_dim) + [max_in_degree, max_out_degree]
        self.bond_max = list(bond_features_dim)
        self.num_feats = max(na + 2, nb)

    def __call__(self, batch):
        x, edge_attr, degree = batch["x"], batch["edge_attr"], batch["degree"]
        n_nodes = x.shape[0]

        # Node rows: [atom feature indices | degree (z_in) | degree (z_out)]
        node_idx = jnp.concatenate(
            [x.astype(jnp.int32), degree.astype(jnp.int32),
             degree.astype(jnp.int32)], axis=1)
        node_idx = _clamp_columns(node_idx, self.node_max) + self.node_offsets[None, :]
        node_idx = _pad_features(node_idx, self.num_feats, self.pad_index)

        # Edge rows: bond feature indices, padded up to the node feature count
        # with the all-zero-row index (contributes nothing to the sum).
        edge_idx = _clamp_columns(edge_attr, self.bond_max) + self.bond_offsets[None, :]
        edge_idx = _pad_features(edge_idx, self.num_feats, self.pad_index)

        all_idx = jnp.concatenate([node_idx, edge_idx], axis=0)
        # TODO(synk): emit bf16 output (out_dtype=jnp.bfloat16) if downstream
        # tolerates it -- halves output writeback, the binding cost at scale.
        emb = embed_sum(all_idx, self.table, out_dtype=jnp.float32)

        out = dict(batch)
        out["x"] = emb[:n_nodes]
        out["edge_attr"] = emb[n_nodes:]
        return out


# --------------------------------------------------------------------------
# Pure-JAX reference (gather + f32 sum) for correctness check
# --------------------------------------------------------------------------
def _reference(model, batch):
    x, edge_attr, degree = batch["x"], batch["edge_attr"], batch["degree"]
    node = sum(jnp.take(t, x[:, i], axis=0).astype(jnp.float32)
               for i, t in enumerate(model.atom_tables))
    node = node + jnp.take(model.zin_table, degree[:, 0], axis=0).astype(jnp.float32)
    node = node + jnp.take(model.zout_table, degree[:, 0], axis=0).astype(jnp.float32)
    edge = sum(jnp.take(t, edge_attr[:, i], axis=0).astype(jnp.float32)
               for i, t in enumerate(model.bond_tables))
    return node, edge


if __name__ == "__main__":
    d_model = 128                      # multiple of 128 -> lane-dense output
    atom_features_dim = [5, 7, 3]      # vocabs 6, 8, 4
    bond_features_dim = [4, 6]         # vocabs 5, 7
    max_in_degree = 10
    max_out_degree = 10
    num_nodes, num_edges = 16, 24

    root = jax.random.PRNGKey(0)
    k_params, k_x, k_e, k_d = jax.random.split(root, 4)

    model = GraphEmbeddingPallas(k_params, d_model, atom_features_dim,
                                 bond_features_dim, max_in_degree, max_out_degree)

    # deterministic synthetic graph batch
    x_cols = [jax.random.randint(jax.random.fold_in(k_x, i),
                                 (num_nodes,), 0, df + 1)
              for i, df in enumerate(atom_features_dim)]
    e_cols = [jax.random.randint(jax.random.fold_in(k_e, i),
                                 (num_edges,), 0, df + 1)
              for i, df in enumerate(bond_features_dim)]
    batch = {
        "x": jnp.stack(x_cols, axis=1).astype(jnp.int32),          # (16, 3)
        "edge_attr": jnp.stack(e_cols, axis=1).astype(jnp.int32),  # (24, 2)
        "degree": jax.random.randint(k_d, (num_nodes, 1), 0,
                                     max_in_degree + 1).astype(jnp.int32),
    }

    out = model(batch)
    jax.block_until_ready(out["x"])
    jax.block_until_ready(out["edge_attr"])

    ref_node, ref_edge = _reference(model, batch)
    assert out["x"].shape == (num_nodes, d_model)
    assert out["edge_attr"].shape == (num_edges, d_model)
    # bf16 tables: MXU products are exact (0/1 * bf16) and accumulation is f32
    # in both kernel and reference, so the match is tight.
    assert jnp.allclose(out["x"], ref_node, atol=1e-5)
    assert jnp.allclose(out["edge_attr"], ref_edge, atol=1e-5)

    print("KERNEL_OK")
</pallas_src>

<mosaic_0001>
module attributes {stable_mosaic.version = 11 : i64} {
  func.func @_embed_sum_kernel(%arg0: i32, %arg1: memref<24x5xi32, #tpu.memory_space<vmem>>, %arg2: memref<128x128xbf16, #tpu.memory_space<vmem>>, %arg3: memref<24x128xf32, #tpu.memory_space<vmem>>) attributes {dimension_semantics = [#tpu.dimension_semantics<parallel>], iteration_bounds = array<i64: 2>, scalar_prefetch = 0 : i64, scratch_operands = 0 : i64, tpu.core_type = #tpu.core_type<tc>, window_params = [{transform_indices = @transform_0, window_bounds = array<i64: 24, 5>}, {pipeline_mode = #tpu.pipeline_mode<synchronous>, transform_indices = @transform_1, window_bounds = array<i64: 128, 128>}, {transform_indices = @transform_2, window_bounds = array<i64: 24, 128>}]} {
    %c0 = arith.constant 0 : index
    %c0_0 = arith.constant 0 : index
    %0 = vector.load %arg1[%c0, %c0_0] : memref<24x5xi32, #tpu.memory_space<vmem>>, vector<24x5xi32>
    %c0_1 = arith.constant 0 : index
    %c0_2 = arith.constant 0 : index
    %1 = vector.load %arg2[%c0_1, %c0_2] : memref<128x128xbf16, #tpu.memory_space<vmem>>, vector<128x128xbf16>
    %2 = tpu.iota {dimensions = array<i32: 1>} : vector<1x128xi32>
    %3 = vector.extract_strided_slice %0 {offsets = [0, 0], sizes = [24, 1], strides = [1, 1]} : vector<24x5xi32> to vector<24x1xi32>
    %4 = vector.broadcast %2 : vector<1x128xi32> to vector<24x128xi32>
    %5 = vector.broadcast %3 : vector<24x1xi32> to vector<24x128xi32>
    %6 = arith.cmpi eq, %4, %5 : vector<24x128xi32>
    %7 = vector.extract_strided_slice %0 {offsets = [0, 1], sizes = [24, 1], strides = [1, 1]} : vector<24x5xi32> to vector<24x1xi32>
    %8 = vector.broadcast %2 : vector<1x128xi32> to vector<24x128xi32>
    %9 = vector.broadcast %7 : vector<24x1xi32> to vector<24x128xi32>
    %10 = arith.cmpi eq, %8, %9 : vector<24x128xi32>
    %11 = arith.ori %6, %10 : vector<24x128xi1>
    %12 = vector.extract_strided_slice %0 {offsets = [0, 2], sizes = [24, 1], strides = [1, 1]} : vector<24x5xi32> to vector<24x1xi32>
    %13 = vector.broadcast %2 : vector<1x128xi32> to vector<24x128xi32>
    %14 = vector.broadcast %12 : vector<24x1xi32> to vector<24x128xi32>
    %15 = arith.cmpi eq, %13, %14 : vector<24x128xi32>
    %16 = arith.ori %11, %15 : vector<24x128xi1>
    %17 = vector.extract_strided_slice %0 {offsets = [0, 3], sizes = [24, 1], strides = [1, 1]} : vector<24x5xi32> to vector<24x1xi32>
    %18 = vector.broadcast %2 : vector<1x128xi32> to vector<24x128xi32>
    %19 = vector.broadcast %17 : vector<24x1xi32> to vector<24x128xi32>
    %20 = arith.cmpi eq, %18, %19 : vector<24x128xi32>
    %21 = arith.ori %16, %20 : vector<24x128xi1>
    %22 = vector.extract_strided_slice %0 {offsets = [0, 4], sizes = [24, 1], strides = [1, 1]} : vector<24x5xi32> to vector<24x1xi32>
    %23 = vector.broadcast %2 : vector<1x128xi32> to vector<24x128xi32>
    %24 = vector.broadcast %22 : vector<24x1xi32> to vector<24x128xi32>
    %25 = arith.cmpi eq, %23, %24 : vector<24x128xi32>
    %26 = arith.ori %21, %25 : vector<24x128xi1>
    %27 = arith.extui %26 : vector<24x128xi1> to vector<24x128xi32>
    %28 = arith.sitofp %27 : vector<24x128xi32> to vector<24x128xf32>
    %29 = arith.truncf %28 : vector<24x128xf32> to vector<24x128xbf16>
    %cst = arith.constant dense<0.000000e+00> : vector<24x128xf32>
    %30 = tpu.matmul %29, %1, %cst {dimension_numbers = #tpu.dot_dimension_numbers<[1], [0], [0], [1], [0, 0, 1, 1], [], []>} : vector<24x128xbf16>, vector<128x128xbf16>, vector<24x128xf32> -> vector<24x128xf32>
    %c0_3 = arith.constant 0 : index
    %c0_4 = arith.constant 0 : index
    %31 = vector.load %arg3[%c0_3, %c0_4] : memref<24x128xf32, #tpu.memory_space<vmem>>, vector<24x128xf32>
    tpu.vector_store %arg3[%c0_3, %c0_4], %30 {strides = array<i32>} : memref<24x128xf32, #tpu.memory_space<vmem>>, vector<24x128xf32>,
    return
  }
  func.func @transform_0(%arg0: i32) -> (i32, i32) {
    %c0_i32 = arith.constant 0 : i32
    %c0_i32_0 = arith.constant 0 : i32
    return %arg0, %c0_i32 : i32, i32
  }
  func.func @transform_1(%arg0: i32) -> (i32, i32) {
    %c0_i32 = arith.constant 0 : i32
    %c0_i32_0 = arith.constant 0 : i32
    %c0_i32_1 = arith.constant 0 : i32
    return %c0_i32, %c0_i32_0 : i32, i32
  }
  func.func @transform_2(%arg0: i32) -> (i32, i32) {
    %c0_i32 = arith.constant 0 : i32
    %c0_i32_0 = arith.constant 0 : i32
    return %arg0, %c0_i32 : i32, i32
  }
}

</mosaic_0001>

<llo_original>
// kernel: tpu_custom_call.1
$region0: #{tpu_custom_call.1}
  #allocation0 [shape = 'u32[]', space=smem, size = 0x4, offset = 0x4, fixed_abs, tag = 'smem constant byte address 0x4 - core index']
  #allocation1 [shape = 'u32[72,128]{1,0:T(1,128)}', space=vmem, size = 0x9000, scoped, tag = 'internal scratch']
  %s0 = inlined_call_operand.vmem [shape: s32[48,5], index: 0, kind: input, shape index: {}]
  %s1 = inlined_call_operand.hbm [shape: bf16[128,128], index: 1, kind: input, shape index: {}]
  %s2 = inlined_call_operand.hbm [shape: f32[48,128], index: 2, kind: output, shape index: {}]
  %s3 = sld [smem:[#allocation0]]
  $region45: #{tpu_custom_call.1} parent=0
    _
  %s5 = ssub.s32 1, %s3
  %s6 = scalar_select 0, %s5, %s3
  $region1: #{tpu_custom_call.1} parent=0
    #allocation2 [shape = 'u8[32768]{0}', space=vmem, size = 0x8000, scoped, tag = 'input window, operand 1, single buffered']
    #allocation3 [shape = 's32[2]{0}', space=sflag, size = 0x8, scoped, tag = 'scoped memory for tpu_custom_call.1']
    #allocation4 [shape = 's32[2]{0}', space=sflag, size = 0x8, scoped, tag = 'scoped memory for tpu_custom_call.1']
    #allocation5 [shape = 'u8[24576]{0}', space=vmem, size = 0x6000, scoped, tag = 'output window, operand 0']
    %7 = vsyncpa [#allocation3], 0
    %8 = vsyncpa [#allocation4], 0
    %s9 = scalar_lea.sflag [#allocation4], 1
    %10 = vsyncpa %s9, 0
    loop: start=0, step=1, limit=4
    $region2: #{tpu_custom_call.1} parent=1 // loop_pre_header
      _
    $region3: #{tpu_custom_call.1} parent=1 // loop_header
      %s12 = sphi 0, %s16
      %p13 = scmp.ge.s32.totalorder %s12, 4
      %s22 = sphi 0, %s24
      %s25 = sphi 0, %s22
      %s26 = sphi 0, %s25
      %s42 = sphi 0, %s26
      %s46 = sphi 0, %s46
      %s48 = sphi 0, %s46
      %s49 = sphi 0, %s48
      %s63 = sphi 0, %s49
      %s69 = sphi 0, %s71
      %s72 = sphi 0, %s69
      %s73 = sphi 0, %s72
      %s89 = sphi 0, %s73
    $region4: #{tpu_custom_call.1} parent=1 // loop_header_branch
      %15 = sbr.rel (%p13) target = $region8
    $region5: #{tpu_custom_call.1} parent=1 // loop_body
      %s17 = ssub.s32 %s12, 1
      %s18 = ssub.s32 %s12, 2
      %s19 = sadd.s32 %s12, 1
      %s20 = ssub.s32 %s12, %s19
      %p21 = scmp.eq.s32.totalorder %s20, 0
      %s23 = sadd.s32 %s22, 1
      %s24 = scalar_select %p21, %s22, %s23
      %p27 = pneg %p21
      %p28 = scmp.eq.s32.totalorder %s12, 1
      %p29 = por %p27, %p28
      %p30 = scmp.ne.s32.totalorder %s22, %s25
      %p31 = scmp.eq.s32.totalorder %s12, 0
      %p32 = por %p30, %p31
      %p33 = scmp.ne.s32.totalorder %s22, %s25
      %p34 = scmp.eq.s32.totalorder %s17, 1
      %p35 = por %p33, %p34
      %p36 = scmp.ne.s32.totalorder %s25, %s26
      %p37 = scmp.eq.s32.totalorder %s17, 0
      %p38 = por %p36, %p37
      %p39 = scmp.ne.s32.totalorder %s25, %s26
      %p40 = scmp.eq.s32.totalorder %s18, 1
      %p41 = por %p39, %p40
      %p43 = scmp.ne.s32.totalorder %s26, %s42
      %p44 = scmp.eq.s32.totalorder %s18, 0
      %p45 = por %p43, %p44
      %s47 = sadd.s32 %s46, 1
      %p50 = scmp.eq.s32.totalorder %s12, 1
      %p51 = scmp.ne.s32.totalorder %s46, %s48
      %p52 = scmp.eq.s32.totalorder %s12, 0
      %p53 = por %p51, %p52
      %p54 = scmp.ne.s32.totalorder %s46, %s48
      %p55 = scmp.eq.s32.totalorder %s17, 1
      %p56 = por %p54, %p55
      %p57 = scmp.ne.s32.totalorder %s48, %s49
      %p58 = scmp.eq.s32.totalorder %s17, 0
      %p59 = por %p57, %p58
      %p60 = scmp.ne.s32.totalorder %s48, %s49
      %p61 = scmp.eq.s32.totalorder %s18, 1
      %p62 = por %p60, %p61
      %p64 = scmp.ne.s32.totalorder %s49, %s63
      %p65 = scmp.eq.s32.totalorder %s18, 0
      %p66 = por %p64, %p65
      %s67 = ssub.s32 %s12, %s19
      %p68 = scmp.eq.s32.totalorder %s67, 0
      %s70 = sadd.s32 %s69, 1
      %s71 = scalar_select %p68, %s69, %s70
      %p74 = pneg %p68
      %p75 = scmp.eq.s32.totalorder %s12, 1
      %p76 = por %p74, %p75
      %p77 = scmp.ne.s32.totalorder %s69, %s72
      %p78 = scmp.eq.s32.totalorder %s12, 0
      %p79 = por %p77, %p78
      %p80 = scmp.ne.s32.totalorder %s69, %s72
      %p81 = scmp.eq.s32.totalorder %s17, 1
      %p82 = por %p80, %p81
      %p83 = scmp.ne.s32.totalorder %s72, %s73
      %p84 = scmp.eq.s32.totalorder %s17, 0
      %p85 = por %p83, %p84
      %p86 = scmp.ne.s32.totalorder %s72, %s73
      %p87 = scmp.eq.s32.totalorder %s18, 1
      %p88 = por %p86, %p87
      %p90 = scmp.ne.s32.totalorder %s73, %s89
      %p91 = scmp.eq.s32.totalorder %s18, 0
      %p92 = por %p90, %p91
      %p93 = scmp.le.s32.totalorder 1, %s12
      %p94 = scmp.lt.s32.totalorder %s12, 3
      %p95 = pnand %p93, %p94
      %p96 = pneg %p95
      // Predicated region
      $region9: #{tpu_custom_call.1} parent=5 // pred_check
        _
      $region10: #{tpu_custom_call.1} parent=5 // pred_check_branch
        %98 = sbr.rel (%p95) target = $region12
      $region11: #{tpu_custom_call.1} parent=5 // pred_region
        %s99 = ssub.s32 %s12, 1
        // Predicated region
        $region13: #{tpu_custom_call.1} parent=11 // pred_check
          %p100 = pneg %p59
        $region14: #{tpu_custom_call.1} parent=11 // pred_check_branch
          %102 = sbr.rel (%p100) target = $region16
        $region15: #{tpu_custom_call.1} parent=11 // pred_region
          %104 = vsyncadd [#allocation3], 0
          %s105 = sshll.u32 %s1, 4
          %s106 = int_to_ptr.hbm [resolvable:$true] %s105
          %s107 = sshll.u32 [#allocation2], 4
          %s108 = int_to_ptr.vmem [resolvable:$true] %s107
          %113 = dma.hbm_to_vmem [thread:$0]  %s106, 1024, %s108, [#allocation3], 64, 64, 4
        $region16: #{tpu_custom_call.1} parent=11 // pred_fallthru
          _
      $region12: #{tpu_custom_call.1} parent=5 // pred_fallthru
        _
      %p114 = scmp.lt.s32.totalorder %s12, 2
      // Predicated region
      $region17: #{tpu_custom_call.1} parent=5 // pred_check
        %p115 = pneg %p114
      $region18: #{tpu_custom_call.1} parent=5 // pred_check_branch
        %117 = sbr.rel (%p115) target = $region20
      $region19: #{tpu_custom_call.1} parent=5 // pred_region
        // Predicated region
        $region21: #{tpu_custom_call.1} parent=19 // pred_check
          %p118 = pneg %p32
        $region22: #{tpu_custom_call.1} parent=19 // pred_check_branch
          %120 = sbr.rel (%p118) target = $region24
        $region23: #{tpu_custom_call.1} parent=19 // pred_region
          %s121 = smul.u32 3, %s12
          %p122 = scmp.lt.s32.totalorder %s121, 5
          %s123 = scalar_select %p122, %s121, 5
          %s124 = smul.addr %s123, 8
          %s125 = scalar_lea.vmem %s0, %s124
          %s126 = smul.u32 3, %s12
        $region24: #{tpu_custom_call.1} parent=19 // pred_fallthru
          _
      $region20: #{tpu_custom_call.1} parent=5 // pred_fallthru
        _
      %p127 = scmp.le.s32.totalorder 1, %s12
      %p128 = scmp.lt.s32.totalorder %s12, 3
      %p129 = pnand %p127, %p128
      %p130 = pneg %p129
      // Predicated region
      $region25: #{tpu_custom_call.1} parent=5 // pred_check
        _
      $region26: #{tpu_custom_call.1} parent=5 // pred_check_branch
        %132 = sbr.rel (%p129) target = $region28
      $region27: #{tpu_custom_call.1} parent=5 // pred_region
        %s133 = ssub.s32 %s12, 1
        // Predicated region
        $region29: #{tpu_custom_call.1} parent=27 // pred_check
          %p134 = pneg %p59
        $region30: #{tpu_custom_call.1} parent=27 // pred_check_branch
          %136 = sbr.rel (%p134) target = $region32
        $region31: #{tpu_custom_call.1} parent=27 // pred_region
          %138 = dma.done [#allocation3], 1024
        $region32: #{tpu_custom_call.1} parent=27 // pred_fallthru
          _
        %s139 = smul.u32 3, %s17
        %p140 = scmp.lt.s32.totalorder %s139, 5
        %s141 = scalar_select %p140, %s139, 5
        %s142 = smul.addr %s141, 8
        %s143 = scalar_lea.vmem %s0, %s142
        %p144 = pneg %p38
        %p145 = pneg %p35
        %p146 = pneg %p59
        %p147 = pneg %p56
        %p148 = pneg %p85
        %p149 = pneg %p82
        %s150 = sand.u32 %s72, 1
        %s151 = scalar_lea.sflag [#allocation4], %s150
        %s152 = sand.u32 %s72, 1
        %s153 = smul.addr %s152, 24
        %s154 = scalar_lea.vmem [#allocation5], %s153
        %s155 = smul.u32 3, %s17
        %p156 = scmp.lt.s32.totalorder %s155, 5
        %s157 = scalar_select %p156, %s155, 5
        %s158 = smul.addr %s157, 8
        %s159 = scalar_lea.vmem %s0, %s158
        %s160 = smul.u32 3, %s17
        %s161 = smul.u32 3, %s17
        %v162 = vld [vmem:[%s159] sm:$0xff]
        %v163 = vld [vmem:[%s159 + $0x8] sm:$0xff]
        %v164 = vld [vmem:[%s159 + $0x10] sm:$0xff]
        %v165 = vld [vmem:[#allocation2] sm:$0xf]
        %v166 = vld [vmem:[#allocation2 + $0x4] sm:$0xf]
        %v167 = vld [vmem:[#allocation2 + $0x8] sm:$0xf]
        %v168 = vld [vmem:[#allocation2 + $0xc] sm:$0xf]
        %v169 = vld [vmem:[#allocation2 + $0x10] sm:$0xf]
        %v170 = vld [vmem:[#allocation2 + $0x14] sm:$0xf]
        %v171 = vld [vmem:[#allocation2 + $0x18] sm:$0xf]
        %v172 = vld [vmem:[#allocation2 + $0x1c] sm:$0xf]
        %v173 = vld [vmem:[#allocation2 + $0x20] sm:$0xf]
        %v174 = vld [vmem:[#allocation2 + $0x24] sm:$0xf]
        %v175 = vld [vmem:[#allocation2 + $0x28] sm:$0xf]
        %v176 = vld [vmem:[#allocation2 + $0x2c] sm:$0xf]
        %v177 = vld [vmem:[#allocation2 + $0x30] sm:$0xf]
        %v178 = vld [vmem:[#allocation2 + $0x34] sm:$0xf]
        %v179 = vld [vmem:[#allocation2 + $0x38] sm:$0xf]
        %v180 = vld [vmem:[#allocation2 + $0x3c] sm:$0xf]
        %v181 = vlaneseq
        %v182 = vand.u32 %v181, 127
        %183 = vset.pattern.permute.xlu0 0
        %184 = vperm.xlu0 %183, %v162
        %v185 = vpop.permute.xlu0 %184
        %186 = vset.pattern.permute.xlu0 0
        %187 = vperm.xlu0 %186, %v163
        %v188 = vpop.permute.xlu0 %187
        %189 = vset.pattern.permute.xlu0 0
        %190 = vperm.xlu0 %189, %v164
        %v191 = vpop.permute.xlu0 %190
        %vm192 = vcmp.eq.s32.totalorder %v182, %v185
        %vm193 = vcmp.eq.s32.totalorder %v182, %v188
        %vm194 = vcmp.eq.s32.totalorder %v182, %v191
        %195 = vset.pattern.permute.xlu0 1
        %196 = vperm.xlu0 %195, %v162
        %v197 = vpop.permute.xlu0 %196
        %198 = vset.pattern.permute.xlu0 1
        %199 = vperm.xlu0 %198, %v163
        %v200 = vpop.permute.xlu0 %199
        %201 = vset.pattern.permute.xlu0 1
        %202 = vperm.xlu0 %201, %v164
        %v203 = vpop.permute.xlu0 %202
        %vm204 = vcmp.eq.s32.totalorder %v182, %v197
        %vm205 = vcmp.eq.s32.totalorder %v182, %v200
        %vm206 = vcmp.eq.s32.totalorder %v182, %v203
        %vm207 = vmor %vm192, %vm204
        %vm208 = vmor %vm193, %vm205
        %vm209 = vmor %vm194, %vm206
        %210 = vset.pattern.permute.xlu0 2
        %211 = vperm.xlu0 %210, %v162
        %v212 = vpop.permute.xlu0 %211
        %213 = vset.pattern.permute.xlu0 2
        %214 = vperm.xlu0 %213, %v163
        %v215 = vpop.permute.xlu0 %214
        %216 = vset.pattern.permute.xlu0 2
        %217 = vperm.xlu0 %216, %v164
        %v218 = vpop.permute.xlu0 %217
        %vm219 = vcmp.eq.s32.totalorder %v182, %v212
        %vm220 = vcmp.eq.s32.totalorder %v182, %v215
        %vm221 = vcmp.eq.s32.totalorder %v182, %v218
        %vm222 = vmor %vm207, %vm219
        %vm223 = vmor %vm208, %vm220
        %vm224 = vmor %vm209, %vm221
        %225 = vset.pattern.permute.xlu0 3
        %226 = vperm.xlu0 %225, %v162
        %v227 = vpop.permute.xlu0 %226
        %228 = vset.pattern.permute.xlu0 3
        %229 = vperm.xlu0 %228, %v163
        %v230 = vpop.permute.xlu0 %229
        %231 = vset.pattern.permute.xlu0 3
        %232 = vperm.xlu0 %231, %v164
        %v233 = vpop.permute.xlu0 %232
        %vm234 = vcmp.eq.s32.totalorder %v182, %v227
        %vm235 = vcmp.eq.s32.totalorder %v182, %v230
        %vm236 = vcmp.eq.s32.totalorder %v182, %v233
        %vm237 = vmor %vm222, %vm234
        %vm238 = vmor %vm223, %vm235
        %vm239 = vmor %vm224, %vm236
        %240 = vset.pattern.permute.xlu0 4
        %241 = vperm.xlu0 %240, %v162
        %v242 = vpop.permute.xlu0 %241
        %243 = vset.pattern.permute.xlu0 4
        %244 = vperm.xlu0 %243, %v163
        %v245 = vpop.permute.xlu0 %244
        %246 = vset.pattern.permute.xlu0 4
        %247 = vperm.xlu0 %246, %v164
        %v248 = vpop.permute.xlu0 %247
        %vm249 = vcmp.eq.s32.totalorder %v182, %v242
        %vm250 = vcmp.eq.s32.totalorder %v182, %v245
        %vm251 = vcmp.eq.s32.totalorder %v182, %v248
        %vm252 = vmor %vm237, %vm249
        %vm253 = vmor %vm238, %vm250
        %vm254 = vmor %vm239, %vm251
        %v255 = vsel %vm252, 1, 0
        %v256 = vsel %vm253, 1, 0
        %v257 = vsel %vm254, 1, 0
        %v258 = vcvt.s32.f32 %v255
        %v259 = vcvt.s32.f32 %v256
        %v260 = vcvt.s32.f32 %v257
        %v261 = vpack.c.bf16 %v259, %v258
        %v262 = vpack.c.bf16 %v260, %v260
        %v279 = vunpack.c.l.b16 %v165
        %v280 = vunpack.c.l.b16 %v166
        %v281 = vunpack.c.l.b16 %v167
        %v282 = vunpack.c.l.b16 %v168
        %v283 = vunpack.c.l.b16 %v169
        %v284 = vunpack.c.l.b16 %v170
        %v285 = vunpack.c.l.b16 %v171
        %v286 = vunpack.c.l.b16 %v172
        %v287 = vunpack.c.l.b16 %v173
        %v288 = vunpack.c.l.b16 %v174
        %v289 = vunpack.c.l.b16 %v175
        %v290 = vunpack.c.l.b16 %v176
        %v291 = vunpack.c.l.b16 %v177
        %v292 = vunpack.c.l.b16 %v178
        %v293 = vunpack.c.l.b16 %v179
        %v294 = vunpack.c.l.b16 %v180
        %v295 = vpack.c.b16 %v280, %v279
        %v296 = vpack.c.b16 %v282, %v281
        %v297 = vpack.c.b16 %v284, %v283
        %v298 = vpack.c.b16 %v286, %v285
        %v299 = vpack.c.b16 %v288, %v287
        %v300 = vpack.c.b16 %v290, %v289
        %v301 = vpack.c.b16 %v292, %v291
        %v302 = vpack.c.b16 %v294, %v293
        %311 = vmatpush.bf16.msra.mxu0 %v302
        %312 = vmatpush.bf16.msra.mxu0 %v301
        %313 = vmatpush.bf16.msra.mxu0 %v300
        %314 = vmatpush.bf16.msra.mxu0 %v299
        %315 = vmatpush.bf16.msra.mxu0 %v298
        %316 = vmatpush.bf16.msra.mxu0 %v297
        %317 = vmatpush.bf16.msra.mxu0 %v296
        %318 = vmatpush.bf16.msra.mxu0 %v295
        %319 = vmatmul.bf16.gmra.mxu0 %v261
        %v320 = vpop.f32.mrf.mxu0
        %v321 = vadd.f32 0.0, %v320
        %v322 = vpop.f32.mrf.mxu0
        %v323 = vadd.f32 0.0, %v322
        %324 = vmatmul.bf16.gmra.mxu0 %v262
        %v325 = vpop.f32.mrf.mxu0
        %v326 = vadd.f32 0.0, %v325
        %v327 = vpop.f32.mrf.mxu0
        %328 = vdwg.mxu0
        %329 = vst [vmem:[%s154] sm:$0xff] %v321
        %330 = vst [vmem:[%s154 + $0x8] sm:$0xff] %v323
        %331 = vst [vmem:[%s154 + $0x10] sm:$0xff] %v326
        %s332 = sand.u32 %s72, 1
        %s333 = scalar_lea.sflag [#allocation4], %s332
        %s334 = sand.u32 %s72, 1
        %s335 = smul.addr %s334, 24
        %s336 = scalar_lea.vmem [#allocation5], %s335
        // Predicated region
        $region33: #{tpu_custom_call.1} parent=27 // pred_check
          %p337 = pneg %p82
        $region34: #{tpu_custom_call.1} parent=27 // pred_check_branch
          %339 = sbr.rel (%p337) target = $region36
        $region35: #{tpu_custom_call.1} parent=27 // pred_region
          %s340 = smul.u32 3, %s17
          %342 = vsyncadd %s333, 0
          %s343 = smul.addr %s340, 8
          %s344 = scalar_lea.hbm %s2, %s343
          %s345 = sshll.u32 %s336, 4
          %s346 = int_to_ptr.vmem [resolvable:$true] %s345
          %s347 = sshll.u32 %s344, 4
          %s348 = int_to_ptr.hbm [resolvable:$true] %s347
          %353 = dma.vmem_to_hbm [thread:$0]  %s346, 384, %s348, %s333, 128, 128, 8
        $region36: #{tpu_custom_call.1} parent=27 // pred_fallthru
          _
      $region28: #{tpu_custom_call.1} parent=5 // pred_fallthru
        _
      %p354 = scmp.le.s32.totalorder 2, %s12
      // Predicated region
      $region37: #{tpu_custom_call.1} parent=5 // pred_check
        %p355 = pneg %p354
      $region38: #{tpu_custom_call.1} parent=5 // pred_check_branch
        %357 = sbr.rel (%p355) target = $region40
      $region39: #{tpu_custom_call.1} parent=5 // pred_region
        %s358 = ssub.s32 %s12, 2
        // Predicated region
        $region41: #{tpu_custom_call.1} parent=39 // pred_check
          %p359 = pneg %p88
        $region42: #{tpu_custom_call.1} parent=39 // pred_check_branch
          %361 = sbr.rel (%p359) target = $region44
        $region43: #{tpu_custom_call.1} parent=39 // pred_region
          %s362 = sand.u32 %s73, 1
          %s363 = scalar_lea.sflag [#allocation4], %s362
          %s364 = sand.u32 %s73, 1
          %s365 = smul.addr %s364, 24
          %s366 = scalar_lea.vmem [#allocation5], %s365
          %368 = dma.done %s363, 384
        $region44: #{tpu_custom_call.1} parent=39 // pred_fallthru
          _
      $region40: #{tpu_custom_call.1} parent=5 // pred_fallthru
        _
    $region6: #{tpu_custom_call.1} parent=1 // loop_footer
      %s16 = sadd.s32 1, %s12
    $region7: #{tpu_custom_call.1} parent=1 // loop_footer_branch
      %11 = sbr.rel target = $region3
    $region8: #{tpu_custom_call.1} parent=1 // loop_exit
      _
    %369 = vsyncpa [#allocation3], 1
    %s370 = scalar_lea.sflag [#allocation3], 1
    %371 = vsyncpa %s370, 1
    %372 = vsyncpa [#allocation4], 1
    %s373 = scalar_lea.sflag [#allocation4], 1
    %374 = vsyncpa %s373, 1

</llo_original>
